<compile_context>
chip_gen: v6e
topology: v6e:2x2x1
jax: 0.10.0
libtpu: 0.0.40
codegen_flags: <defaults>
</compile_context>

<pallas_src>
import functools

import jax
import jax.numpy as jnp
from jax import lax
from jax.experimental import pallas as pl
from jax.experimental.pallas import tpu as pltpu

LANES = 128
ACC_ROWS = 64              # (64, 128) f32 accumulator = 8 vregs
CHUNK_ROWS = ACC_ROWS      # rows per inner-loop iteration (added straight into acc)
MAX_BLOCK_BYTES = 4 << 20  # ~4 MiB per input block per grid step


def _round_up(a, b):
    return ((a + b - 1) // b) * b


def _tukey_kernel(x_ref, y_ref, o_ref, acc_ref, *, inv_t2, scale, block_rows):
    k = pl.program_id(0)

    @pl.when(k == 0)
    def _init():
        acc_ref[...] = jnp.zeros_like(acc_ref)

    def tukey_factor(xs, ys):
        # 1 - (1 - (r/t)^2)^3 == u2*(3 + u2*(u2 - 3))  (Horner; monotone in u2,
        # equals 1 at u2 == 1), clamped to 1 for the r >= t branch.
        # NOTE: NaN inputs propagate as NaN here instead of mapping to t^2/6.
        d = xs.astype(jnp.float32) - ys.astype(jnp.float32)
        u2 = (d * d) * inv_t2
        poly = u2 * (3.0 + u2 * (u2 - 3.0))
        return jnp.minimum(poly, 1.0)

    n_full = block_rows // CHUNK_ROWS
    rem = block_rows % CHUNK_ROWS

    if n_full > 0:
        def body(i, carry):
            start = pl.multiple_of(i * CHUNK_ROWS, CHUNK_ROWS)
            acc_ref[...] += tukey_factor(x_ref[pl.ds(start, CHUNK_ROWS), :],
                                         y_ref[pl.ds(start, CHUNK_ROWS), :])
            return carry

        lax.fori_loop(0, n_full, body, 0, unroll=min(8, n_full))

    if rem:
        start = n_full * CHUNK_ROWS
        sl = pl.ds(0, rem)
        acc_ref[sl, :] = acc_ref[sl, :] + tukey_factor(
            x_ref[pl.ds(start, rem), :], y_ref[pl.ds(start, rem), :])

    @pl.when(k == pl.num_programs(0) - 1)
    def _finalize():
        # Single cross-lane reduction + constant scale, applied exactly once.
        o_ref[...] = (jnp.sum(acc_ref[...]) * scale).reshape(1, 1)


def tukey_loss(x, y, t=4.685, reduction="mean"):
    assert x.shape == y.shape

    if reduction != "mean":
        # TODO(synk): PyTorch returns the unreduced elementwise tensor for
        # reduction != 'mean'; provided here in plain JAX (not a Pallas path).
        t = float(t)
        r = jnp.abs(x.astype(jnp.float32) - y.astype(jnp.float32))
        c = t * t / 6.0
        u2 = (r / t) ** 2
        return jnp.where(r < t, (1.0 - (1.0 - u2) ** 3) * c, c)

    batch_size = y.shape[0]
    n = x.size
    itemsize = x.dtype.itemsize
    sublane_mult = max(8, 32 // itemsize)  # 8 for f32, 16 for bf16, 32 for int8

    # Lane-dense (rows, 128) slab, padded so rows splits into num_blocks equal,
    # sublane-aligned blocks.  Zero padding contributes exactly 0 loss, so the
    # kernel hot path never needs a row mask.
    rows = pl.cdiv(n, LANES)
    max_block_rows = max(
        sublane_mult,
        (MAX_BLOCK_BYTES // (LANES * itemsize)) // sublane_mult * sublane_mult)
    num_blocks = pl.cdiv(rows, max_block_rows)
    block_rows = _round_up(pl.cdiv(rows, num_blocks), sublane_mult)
    padded_rows = num_blocks * block_rows
    padded_n = padded_rows * LANES

    xf = x.reshape(-1)
    yf = y.reshape(-1)
    if padded_n != n:
        xf = jnp.pad(xf, (0, padded_n - n))
        yf = jnp.pad(yf, (0, padded_n - n))
    x2 = xf.reshape(padded_rows, LANES)
    y2 = yf.reshape(padded_rows, LANES)

    t = float(t)
    kernel = functools.partial(
        _tukey_kernel,
        inv_t2=1.0 / (t * t),
        scale=(t * t / 6.0) / batch_size,  # 'mean' == sum(loss / batch_size)
        block_rows=block_rows,
    )

    # Double-buffered footprint: 2 inputs x 2 buffers x block_bytes (+ scratch).
    block_bytes = block_rows * LANES * itemsize
    vmem_limit = min(48 << 20, max(16 << 20, 4 * block_bytes + (4 << 20)))

    cost = pl.CostEstimate(
        flops=9 * n,
        transcendentals=0,
        bytes_accessed=2 * n * itemsize + 4,
    )

    out = pl.pallas_call(
        kernel,
        out_shape=jax.ShapeDtypeStruct((1, 1), jnp.float32),
        grid_spec=pltpu.PrefetchScalarGridSpec(
            num_scalar_prefetch=0,
            grid=(num_blocks,),
            in_specs=[
                pl.BlockSpec((block_rows, LANES), lambda i: (i, 0)),
                pl.BlockSpec((block_rows, LANES), lambda i: (i, 0)),
            ],
            out_specs=pl.BlockSpec((1, 1), lambda i: (0, 0)),
            scratch_shapes=[pltpu.VMEM((ACC_ROWS, LANES), jnp.float32)],
        ),
        # TODO(synk): on dual-TC chips (v7x) a leading pltpu.CORE_PARALLEL axis
        # of size 2 (per-core partial outputs) would shard this reduction
        # across both TensorCores; kept single-core here for portable lowering.
        compiler_params=pltpu.CompilerParams(
            dimension_semantics=("arbitrary",),
            vmem_limit_bytes=int(vmem_limit),
        ),
        cost_estimate=cost,
    )(x2, y2)

    return out[0, 0]


def tukey_loss_ref(x, y, t=4.685):
    size = y.shape[0]
    r = jnp.abs(x - y)
    index = (r < t).astype(jnp.float32)
    c = t * t / 6.0
    loss = (1.0 - (1.0 - (r / t) ** 2) ** 3) * c * index + (1.0 - index) * c
    return jnp.sum(loss / size)


if __name__ == "__main__":
    key = jax.random.PRNGKey(0)
    kx, ky = jax.random.split(key)
    x = jax.random.normal(kx, (2, 4, 16, 16), dtype=jnp.float32) * 3.0
    y = jax.random.normal(ky, (2, 4, 16, 16), dtype=jnp.float32) * 3.0

    out = tukey_loss(x, y)
    out = jax.block_until_ready(out)

    ref = tukey_loss_ref(x, y)
    assert jnp.allclose(out, ref, rtol=1e-5, atol=1e-5), (out, ref)
    print("KERNEL_OK")
</pallas_src>

<mosaic_0001>
module attributes {stable_mosaic.version = 11 : i64} {
  func.func @_tukey_kernel(%arg0: i32, %arg1: memref<16x128xf32, #tpu.memory_space<vmem>>, %arg2: memref<16x128xf32, #tpu.memory_space<vmem>>, %arg3: memref<1x1xf32, #tpu.memory_space<vmem>>, %arg4: memref<64x128xf32, #tpu.memory_space<vmem>>) attributes {dimension_semantics = [#tpu.dimension_semantics<arbitrary>], iteration_bounds = array<i64: 1>, scalar_prefetch = 0 : i64, scratch_operands = 1 : i64, tpu.core_type = #tpu.core_type<tc>, window_params = [{transform_indices = @transform_0, window_bounds = array<i64: 16, 128>}, {transform_indices = @transform_1, window_bounds = array<i64: 16, 128>}, {pipeline_mode = #tpu.pipeline_mode<synchronous>, transform_indices = @transform_2, window_bounds = array<i64: 1, 1>}]} {
    %c0_i32 = arith.constant 0 : i32
    %0 = arith.cmpi eq, %arg0, %c0_i32 : i32
    %1 = arith.extui %0 : i1 to i32
    %c0_i32_0 = arith.constant 0 : i32
    %2 = arith.cmpi ne, %1, %c0_i32_0 : i32
    scf.if %2 {
      %cst_13 = arith.constant 0.000000e+00 : f32
      %23 = vector.broadcast %cst_13 : f32 to vector<64x128xf32>
      %c0_14 = arith.constant 0 : index
      %c0_15 = arith.constant 0 : index
      %24 = vector.load %arg4[%c0_14, %c0_15] : memref<64x128xf32, #tpu.memory_space<vmem>>, vector<64x128xf32>
      tpu.vector_store %arg4[%c0_14, %c0_15], %23 {strides = array<i32>} : memref<64x128xf32, #tpu.memory_space<vmem>>, vector<64x128xf32>,
    } else {
    }
    %c0 = arith.constant 0 : index
    %c0_1 = arith.constant 0 : index
    %3 = vector.load %arg4[%c0, %c0_1] : memref<64x128xf32, #tpu.memory_space<vmem>>, vector<16x128xf32>
    %c0_2 = arith.constant 0 : index
    %c0_3 = arith.constant 0 : index
    %4 = vector.load %arg1[%c0_2, %c0_3] : memref<16x128xf32, #tpu.memory_space<vmem>>, vector<16x128xf32>
    %c0_4 = arith.constant 0 : index
    %c0_5 = arith.constant 0 : index
    %5 = vector.load %arg2[%c0_4, %c0_5] : memref<16x128xf32, #tpu.memory_space<vmem>>, vector<16x128xf32>
    %6 = arith.subf %4, %5 : vector<16x128xf32>
    %7 = arith.mulf %6, %6 : vector<16x128xf32>
    %cst = arith.constant 0.0455596969 : f32
    %8 = vector.broadcast %cst : f32 to vector<16x128xf32>
    %9 = arith.mulf %7, %8 : vector<16x128xf32>
    %cst_6 = arith.constant 3.000000e+00 : f32
    %10 = vector.broadcast %cst_6 : f32 to vector<16x128xf32>
    %11 = arith.subf %9, %10 : vector<16x128xf32>
    %12 = arith.mulf %9, %11 : vector<16x128xf32>
    %cst_7 = arith.constant 3.000000e+00 : f32
    %13 = vector.broadcast %cst_7 : f32 to vector<16x128xf32>
    %14 = arith.addf %13, %12 : vector<16x128xf32>
    %15 = arith.mulf %9, %14 : vector<16x128xf32>
    %cst_8 = arith.constant 1.000000e+00 : f32
    %16 = vector.broadcast %cst_8 : f32 to vector<16x128xf32>
    %17 = arith.minimumf %15, %16 : vector<16x128xf32>
    %18 = arith.addf %3, %17 : vector<16x128xf32>
    %c0_9 = arith.constant 0 : index
    %c0_10 = arith.constant 0 : index
    %19 = vector.load %arg4[%c0_9, %c0_10] : memref<64x128xf32, #tpu.memory_space<vmem>>, vector<16x128xf32>
    tpu.vector_store %arg4[%c0_9, %c0_10], %18 {strides = array<i32>} : memref<64x128xf32, #tpu.memory_space<vmem>>, vector<16x128xf32>,
    %c0_i32_11 = arith.constant 0 : i32
    %20 = arith.cmpi eq, %arg0, %c0_i32_11 : i32
    %21 = arith.extui %20 : i1 to i32
    %c0_i32_12 = arith.constant 0 : i32
    %22 = arith.cmpi ne, %21, %c0_i32_12 : i32
    scf.if %22 {
      %c0_13 = arith.constant 0 : index
      %c0_14 = arith.constant 0 : index
      %23 = vector.load %arg4[%c0_13, %c0_14] : memref<64x128xf32, #tpu.memory_space<vmem>>, vector<64x128xf32>
      %24 = vector.shape_cast %23 : vector<64x128xf32> to vector<1x64x128xf32>
      %cst_15 = arith.constant dense<0.000000e+00> : vector<1xf32>
      %25 = vector.multi_reduction <add>, %24, %cst_15 [1, 2] : vector<1x64x128xf32> to vector<1xf32>
      %26 = vector.shape_cast %25 : vector<1xf32> to vector<1x1x1xf32>
      %27 = vector.extract %26[0, 0, 0] : f32 from vector<1x1x1xf32>
      %cst_16 = arith.constant 1.82910204 : f32
      %28 = arith.mulf %27, %cst_16 : f32
      %29 = vector.broadcast %28 : f32 to vector<1x1xf32>
      %c0_17 = arith.constant 0 : index
      %c0_18 = arith.constant 0 : index
      %30 = vector.load %arg3[%c0_17, %c0_18] : memref<1x1xf32, #tpu.memory_space<vmem>>, vector<1x1xf32>
      tpu.vector_store %arg3[%c0_17, %c0_18], %29 {strides = array<i32>} : memref<1x1xf32, #tpu.memory_space<vmem>>, vector<1x1xf32>,
    } else {
    }
    return
  }
  func.func @transform_0(%arg0: i32) -> (i32, i32) {
    %c0_i32 = arith.constant 0 : i32
    %c0_i32_0 = arith.constant 0 : i32
    return %arg0, %c0_i32 : i32, i32
  }
  func.func @transform_1(%arg0: i32) -> (i32, i32) {
    %c0_i32 = arith.constant 0 : i32
    %c0_i32_0 = arith.constant 0 : i32
    return %arg0, %c0_i32 : i32, i32
  }
  func.func @transform_2(%arg0: i32) -> (i32, i32) {
    %c0_i32 = arith.constant 0 : i32
    %c0_i32_0 = arith.constant 0 : i32
    %c0_i32_1 = arith.constant 0 : i32
    return %c0_i32, %c0_i32_0 : i32, i32
  }
}

</mosaic_0001>

<llo_original>
// kernel: tpu_custom_call.1
$region0: #{tpu_custom_call.1}
  #allocation0 [shape = 'u32[]', space=smem, size = 0x4, offset = 0x4, fixed_abs, tag = 'smem constant byte address 0x4 - core index']
  #allocation1 [shape = 'u32[144,128]{1,0:T(1,128)}', space=vmem, size = 0x12000, scoped, tag = 'internal scratch']
  #allocation2 [shape = 'f32[64,128]{1,0:T(8,128)}', space=vmem, size = 0x8000, scoped, tag = 'scratch operand']
  %s0 = inlined_call_operand.hbm [shape: f32[16,128], index: 0, kind: input, shape index: {}]
  %s1 = inlined_call_operand.hbm [shape: f32[16,128], index: 1, kind: input, shape index: {}]
  %s2 = inlined_call_operand.hbm [shape: f32[1,1], index: 2, kind: output, shape index: {}]
  %s3 = sld [smem:[#allocation0]]
  $region34: #{tpu_custom_call.1} parent=0
    _
  %s5 = ssub.s32 1, %s3
  %s6 = scalar_select 0, %s5, %s3
  $region1: #{tpu_custom_call.1} parent=0
    #allocation3 [shape = 'u8[8192]{0}', space=vmem, size = 0x2000, scoped, tag = 'input window, operand 0, single buffered']
    #allocation4 [shape = 's32[1]{0}', space=sflag, size = 0x4, scoped, tag = 'scoped memory for tpu_custom_call.1']
    #allocation5 [shape = 's32[1]{0}', space=sflag, size = 0x4, scoped, tag = 'scoped memory for tpu_custom_call.1']
    #allocation6 [shape = 'u8[8192]{0}', space=vmem, size = 0x2000, scoped, tag = 'input window, operand 1, single buffered']
    #allocation7 [shape = 's32[1]{0}', space=sflag, size = 0x4, scoped, tag = 'scoped memory for tpu_custom_call.1']
    #allocation8 [shape = 'u8[512]{0}', space=vmem, size = 0x400, scoped, tag = 'output window, operand 0, single buffered']
    %7 = vsyncpa [#allocation4], 0
    %8 = vsyncpa [#allocation7], 0
    %9 = vsyncpa [#allocation5], 0
    // Predicated region
    $region2: #{tpu_custom_call.1} parent=1 // pred_check
      _
    $region3: #{tpu_custom_call.1} parent=1 // pred_check_branch
      %11 = sbr.rel (0) target = $region5
    $region4: #{tpu_custom_call.1} parent=1 // pred_region
      %s13 = ssub.s32 256, 256
      %14 = vsyncadd [#allocation4], %s13
      %s15 = sshll.u32 [#allocation3], 4
      %s16 = int_to_ptr.vmem [resolvable:$true] %s15
      %21 = dma.hbm_to_vmem [thread:$0]  %s0, 256, %s16, [#allocation4], 128, 128, 8
    $region5: #{tpu_custom_call.1} parent=1 // pred_fallthru
      _
    // Predicated region
    $region6: #{tpu_custom_call.1} parent=1 // pred_check
      _
    $region7: #{tpu_custom_call.1} parent=1 // pred_check_branch
      %23 = sbr.rel (0) target = $region9
    $region8: #{tpu_custom_call.1} parent=1 // pred_region
      %s25 = ssub.s32 256, 256
      %26 = vsyncadd [#allocation7], %s25
      %s27 = sshll.u32 [#allocation6], 4
      %s28 = int_to_ptr.vmem [resolvable:$true] %s27
      %33 = dma.hbm_to_vmem [thread:$0]  %s1, 256, %s28, [#allocation7], 128, 128, 8
    $region9: #{tpu_custom_call.1} parent=1 // pred_fallthru
      _
    // Predicated region
    $region10: #{tpu_custom_call.1} parent=1 // pred_check
      _
    $region11: #{tpu_custom_call.1} parent=1 // pred_check_branch
      %35 = sbr.rel (0) target = $region13
    $region12: #{tpu_custom_call.1} parent=1 // pred_region
      %36 = dma.done [#allocation4], 256
    $region13: #{tpu_custom_call.1} parent=1 // pred_fallthru
      _
    // Predicated region
    $region14: #{tpu_custom_call.1} parent=1 // pred_check
      _
    $region15: #{tpu_custom_call.1} parent=1 // pred_check_branch
      %38 = sbr.rel (0) target = $region17
    $region16: #{tpu_custom_call.1} parent=1 // pred_region
      %39 = dma.done [#allocation7], 256
    $region17: #{tpu_custom_call.1} parent=1 // pred_fallthru
      _
    %p40 = scmp.eq.s32.totalorder 0, 0
    // Predicated region
    $region18: #{tpu_custom_call.1} parent=1 // pred_check
      %p41 = pneg %p40
    $region19: #{tpu_custom_call.1} parent=1 // pred_check_branch
      %43 = sbr.rel (%p41) target = $region21
    $region20: #{tpu_custom_call.1} parent=1 // pred_region
      %44 = vst [vmem:[#allocation2] sm:$0xff] 0.0
      %45 = vst [vmem:[#allocation2 + $0x8] sm:$0xff] 0.0
      %46 = vst [vmem:[#allocation2 + $0x10] sm:$0xff] 0.0
      %47 = vst [vmem:[#allocation2 + $0x18] sm:$0xff] 0.0
      %48 = vst [vmem:[#allocation2 + $0x20] sm:$0xff] 0.0
      %49 = vst [vmem:[#allocation2 + $0x28] sm:$0xff] 0.0
      %50 = vst [vmem:[#allocation2 + $0x30] sm:$0xff] 0.0
      %51 = vst [vmem:[#allocation2 + $0x38] sm:$0xff] 0.0
    $region21: #{tpu_custom_call.1} parent=1 // pred_fallthru
      _
    %v52 = vld [vmem:[#allocation2] sm:$0xff]
    %v53 = vld [vmem:[#allocation2 + $0x8] sm:$0xff]
    %v54 = vld [vmem:[#allocation3] sm:$0xff]
    %v55 = vld [vmem:[#allocation3 + $0x8] sm:$0xff]
    %v56 = vld [vmem:[#allocation6] sm:$0xff]
    %v57 = vld [vmem:[#allocation6 + $0x8] sm:$0xff]
    %v58 = vsub.f32 %v54, %v56
    %v59 = vsub.f32 %v55, %v57
    %v60 = vmul.f32 %v58, %v58
    %v61 = vmul.f32 %v59, %v59
    %v62 = vmul.f32 %v60, 0.045559697
    %v63 = vmul.f32 %v61, 0.045559697
    %v64 = vsub.f32 %v62, 3.0
    %v65 = vsub.f32 %v63, 3.0
    %v66 = vmul.f32 %v62, %v64
    %v67 = vmul.f32 %v63, %v65
    %v68 = vadd.f32 %v66, 3.0
    %v69 = vadd.f32 %v67, 3.0
    %v70 = vmul.f32 %v62, %v68
    %v71 = vmul.f32 %v63, %v69
    %v72 = vmin.f32 %v70, 1.0
    %v73 = vmin.f32 %v71, 1.0
    %v74 = vadd.f32 %v52, %v72
    %v75 = vadd.f32 %v53, %v73
    %76 = vst [vmem:[#allocation2] sm:$0xff] %v74
    %77 = vst [vmem:[#allocation2 + $0x8] sm:$0xff] %v75
    // Predicated region
    $region22: #{tpu_custom_call.1} parent=1 // pred_check
      %p78 = pneg %p40
    $region23: #{tpu_custom_call.1} parent=1 // pred_check_branch
      %80 = sbr.rel (%p78) target = $region25
    $region24: #{tpu_custom_call.1} parent=1 // pred_region
      %v81 = vld [vmem:[#allocation2] sm:$0xff]
      %v82 = vld [vmem:[#allocation2 + $0x8] sm:$0xff]
      %v83 = vld [vmem:[#allocation2 + $0x10] sm:$0xff]
      %v84 = vld [vmem:[#allocation2 + $0x18] sm:$0xff]
      %v85 = vld [vmem:[#allocation2 + $0x20] sm:$0xff]
      %v86 = vld [vmem:[#allocation2 + $0x28] sm:$0xff]
      %v87 = vld [vmem:[#allocation2 + $0x30] sm:$0xff]
      %v88 = vld [vmem:[#allocation2 + $0x38] sm:$0xff]
      %v89 = vadd.f32 %v81, %v82
      %v90 = vadd.f32 %v89, %v83
      %v91 = vadd.f32 %v90, %v84
      %v92 = vadd.f32 %v91, %v85
      %v93 = vadd.f32 %v92, %v86
      %v94 = vadd.f32 %v93, %v87
      %v95 = vadd.f32 %v94, %v88
      %96 = vadd.xlane.f32.xlu0 %v95
      %v97 = vpop.xlane.xlu0 %96
      %v98 = vrot.slane %v97, 4
      %v99 = vadd.f32 %v97, %v98
      %v100 = vrot.slane %v99, 2
      %v101 = vadd.f32 %v99, %v100
      %v102 = vrot.slane %v101, 1
      %v103 = vadd.f32 %v101, %v102
      %s104 = vtos %v103
      %s105 = smul.f32 %s104, 1.829102
      %v106 = vstv %s105
      %vm107 = vcmask 0
      %108 = vst.msk [vmem:[#allocation8] sm:$0x1] %vm107, %v106
    $region25: #{tpu_custom_call.1} parent=1 // pred_fallthru
      _
    // Predicated region
    $region26: #{tpu_custom_call.1} parent=1 // pred_check
      _
    $region27: #{tpu_custom_call.1} parent=1 // pred_check_branch
      %110 = sbr.rel (0) target = $region29
    $region28: #{tpu_custom_call.1} parent=1 // pred_region
      %s112 = ssub.s32 16, 16
      %113 = vsyncadd [#allocation5], %s112
      %s115 = sshll.u32 [#allocation8], 4
      %s116 = int_to_ptr.vmem [resolvable:$true] %s115
      %118 = dma.vmem_to_hbm [thread:$0]  %s116, 16, %s2, [#allocation5]
    $region29: #{tpu_custom_call.1} parent=1 // pred_fallthru
      _
    // Predicated region
    $region30: #{tpu_custom_call.1} parent=1 // pred_check
      _
    $region31: #{tpu_custom_call.1} parent=1 // pred_check_branch
      %120 = sbr.rel (0) target = $region33
    $region32: #{tpu_custom_call.1} parent=1 // pred_region
      %121 = dma.done [#allocation5], 16
    $region33: #{tpu_custom_call.1} parent=1 // pred_fallthru
      _
    %122 = vsyncpa [#allocation4], 1
    %123 = vsyncpa [#allocation7], 1
    %124 = vsyncpa [#allocation5], 1

</llo_original>
